<compile_context>
chip_gen: v7x
topology: tpu7x:2x2x1
jax: 0.10.0
libtpu: 0.0.40
codegen_flags: <defaults>
</compile_context>

<pallas_src>
import jax
import jax.numpy as jnp
from jax import lax
from jax.experimental import pallas as pl
from jax.experimental.pallas import tpu as pltpu


def _frozen_bn_kernel(x_ref, p_ref, o_ref):
    # y = x * scale + shift; per-row (per (n, c)) scale/shift broadcast over lanes.
    p = p_ref[...]                      # (row_tile, 2) f32
    scale = p[:, 0:1]
    shift = p[:, 1:2]
    x = x_ref[...].astype(jnp.float32)
    o_ref[...] = (x * scale + shift).astype(o_ref.dtype)


def _round_up(a, b):
    return (a + b - 1) // b * b


def _device_profile():
    """(target_block_bytes, multi_tensorcore) for the local TPU generation."""
    kind = ""
    try:
        kind = jax.devices()[0].device_kind.lower()
    except Exception:
        pass
    if "7" in kind:                      # v7x: ~3.2 TB/s HBM, 64 MiB VMEM, 2 TCs
        return 8 << 20, True
    if "v6" in kind or "trillium" in kind:
        return 4 << 20, False            # v6e: ~1.4 TB/s, single TC
    if "v5" in kind:
        return 3 << 20, False            # v5e: ~0.8 TB/s, single TC
    return 4 << 20, False                # unknown: safe default


def _choose_tiles(nc, hw, itemsize, target_bytes, multi_core):
    """Pick (row_tile, col_tile): lane-dense, ~target_bytes x-blocks."""
    lane = 128
    sub = max(8, 32 // itemsize)                  # f32: 8, bf16: 16, int8: 32
    col_tile = min(_round_up(hw, lane), 16384)    # multiple of 128 (or covers hw)
    rows = (target_bytes // itemsize // col_tile) // sub * sub
    rows = max(sub, min(rows, _round_up(nc, sub)))
    if multi_core:
        # Two TensorCores split the ("parallel","parallel") grid: prefer an even
        # total block count so neither core idles.
        n_row = pl.cdiv(nc, rows)
        n_col = pl.cdiv(hw, col_tile)
        if (n_row * n_col) % 2 == 1 and nc > sub:
            rows = max(sub, _round_up(pl.cdiv(nc, n_row + 1), sub))
    return rows, col_tile


def frozen_batch_norm_2d(x, weight, bias, running_mean, running_var, *, eps=1e-05):
    """x: (N, C, H, W); weight/bias/running_mean/running_var: (C,)."""
    N, C, H, W = x.shape
    NC, HW = N * C, H * W
    itemsize = jnp.dtype(x.dtype).itemsize

    # O(C) preprocessing in plain jnp — exactly torch's formula.
    w32 = weight.astype(jnp.float32)
    b32 = bias.astype(jnp.float32)
    rm32 = running_mean.astype(jnp.float32)
    rv32 = running_var.astype(jnp.float32)
    scale_c = w32 * lax.rsqrt(rv32 + jnp.float32(eps))
    shift_c = b32 - rm32 * scale_c

    x2d = x.reshape(NC, HW)
    # Row r = n*C + c  ->  channel c; tile channel params over the batch and
    # pack [scale, shift] into one (NC, 2) array (single param DMA per step).
    scale_r = jnp.tile(scale_c, (N,))
    shift_r = jnp.tile(shift_c, (N,))
    params = jnp.stack([scale_r, shift_r], axis=-1)          # (NC, 2) f32

    target_bytes, multi_core = _device_profile()
    row_tile, col_tile = _choose_tiles(NC, HW, itemsize, target_bytes, multi_core)

    # cdiv grid: no wrapper-side padding, no output slice; edge blocks are
    # padded on read and masked on store by Pallas.
    grid = (pl.cdiv(NC, row_tile), pl.cdiv(HW, col_tile))
    x_spec = pl.BlockSpec((row_tile, col_tile), lambda i, j: (i, j))
    p_spec = pl.BlockSpec((row_tile, 2), lambda i, j: (i, 0))

    # VMEM budget: x in + out double-buffered, plus the lane-padded
    # (row_tile, 128) f32 param block double-buffered, plus headroom.
    block_bytes = row_tile * col_tile * itemsize
    vmem_need = 4 * block_bytes + 2 * row_tile * 128 * 4 + (2 << 20)
    vmem_limit = int(min(max(vmem_need, 16 << 20), 48 << 20))

    out2d = pl.pallas_call(
        _frozen_bn_kernel,
        out_shape=jax.ShapeDtypeStruct((NC, HW), x.dtype),
        grid_spec=pltpu.PrefetchScalarGridSpec(
            num_scalar_prefetch=0,
            grid=grid,
            in_specs=[x_spec, p_spec],
            out_specs=x_spec,
        ),
        compiler_params=pltpu.CompilerParams(
            dimension_semantics=("parallel", "parallel"),
            vmem_limit_bytes=vmem_limit,
        ),
        cost_estimate=pl.CostEstimate(
            flops=2 * NC * HW,
            transcendentals=0,
            bytes_accessed=2 * NC * HW * itemsize + NC * 2 * 4,
        ),
    )(x2d, params)

    return out2d.reshape(N, C, H, W)


def _reference(x, weight, bias, running_mean, running_var):
    eps = 1e-05
    w = weight.reshape(1, -1, 1, 1)
    b = bias.reshape(1, -1, 1, 1)
    rv = running_var.reshape(1, -1, 1, 1)
    rm = running_mean.reshape(1, -1, 1, 1)
    scale = w * lax.rsqrt(rv + eps)
    bias_ = b - rm * scale
    return x * scale + bias_


def _make_inputs(key, N, C, H, W):
    kx, kw, kb, km, kv = jax.random.split(key, 5)
    x = jax.random.normal(kx, (N, C, H, W), dtype=jnp.float32)
    # "Frozen" buffers: __init__ gives ones/zeros; perturb deterministically so
    # the affine transform is non-trivial.
    weight = jnp.ones((C,), jnp.float32) + 0.1 * jax.random.normal(kw, (C,))
    bias = jnp.zeros((C,), jnp.float32) + 0.1 * jax.random.normal(kb, (C,))
    running_mean = jnp.zeros((C,), jnp.float32) + 0.1 * jax.random.normal(km, (C,))
    running_var = jnp.ones((C,), jnp.float32) + 0.1 * jnp.abs(
        jax.random.normal(kv, (C,)))
    return x, weight, bias, running_mean, running_var


if __name__ == "__main__":
    key = jax.random.PRNGKey(0)
    k0, k1 = jax.random.split(key, 2)

    # Primary small case: (2, 4, 16, 16).
    x, w, b, rm, rv = _make_inputs(k0, 2, 4, 16, 16)
    out = jax.block_until_ready(frozen_batch_norm_2d(x, w, b, rm, rv))
    ref = _reference(x, w, b, rm, rv)
    assert out.shape == x.shape
    assert jnp.allclose(out, ref, atol=1e-5, rtol=1e-5), "mismatch vs reference"

    # Ragged case exercising partial edge blocks (NC, HW not tile multiples).
    x2, w2, b2, rm2, rv2 = _make_inputs(k1, 2, 3, 14, 14)
    out2 = jax.block_until_ready(frozen_batch_norm_2d(x2, w2, b2, rm2, rv2))
    ref2 = _reference(x2, w2, b2, rm2, rv2)
    assert out2.shape == x2.shape
    assert jnp.allclose(out2, ref2, atol=1e-5, rtol=1e-5), "ragged mismatch"

    print("KERNEL_OK")
</pallas_src>

<mosaic_0001>
module attributes {stable_mosaic.version = 11 : i64} {
  func.func @_frozen_bn_kernel(%arg0: i32, %arg1: i32, %arg2: memref<8x256xf32, #tpu.memory_space<vmem>>, %arg3: memref<8x2xf32, #tpu.memory_space<vmem>>, %arg4: memref<8x256xf32, #tpu.memory_space<vmem>>) attributes {dimension_semantics = [#tpu.dimension_semantics<parallel>, #tpu.dimension_semantics<parallel>], iteration_bounds = array<i64: 1, 1>, scalar_prefetch = 0 : i64, scratch_operands = 0 : i64, tpu.core_type = #tpu.core_type<tc>, window_params = [{transform_indices = @transform_0, window_bounds = array<i64: 8, 256>}, {transform_indices = @transform_1, window_bounds = array<i64: 8, 2>}, {transform_indices = @transform_2, window_bounds = array<i64: 8, 256>}]} {
    %c0 = arith.constant 0 : index
    %c0_0 = arith.constant 0 : index
    %0 = vector.load %arg3[%c0, %c0_0] : memref<8x2xf32, #tpu.memory_space<vmem>>, vector<8x2xf32>
    %1 = vector.extract_strided_slice %0 {offsets = [0, 0], sizes = [8, 1], strides = [1, 1]} : vector<8x2xf32> to vector<8x1xf32>
    %2 = vector.extract_strided_slice %0 {offsets = [0, 1], sizes = [8, 1], strides = [1, 1]} : vector<8x2xf32> to vector<8x1xf32>
    %c0_1 = arith.constant 0 : index
    %c0_2 = arith.constant 0 : index
    %3 = vector.load %arg2[%c0_1, %c0_2] : memref<8x256xf32, #tpu.memory_space<vmem>>, vector<8x256xf32>
    %4 = vector.broadcast %1 : vector<8x1xf32> to vector<8x256xf32>
    %5 = arith.mulf %3, %4 : vector<8x256xf32>
    %6 = vector.broadcast %2 : vector<8x1xf32> to vector<8x256xf32>
    %7 = arith.addf %5, %6 : vector<8x256xf32>
    %c0_3 = arith.constant 0 : index
    %c0_4 = arith.constant 0 : index
    %8 = vector.load %arg4[%c0_3, %c0_4] : memref<8x256xf32, #tpu.memory_space<vmem>>, vector<8x256xf32>
    tpu.vector_store %arg4[%c0_3, %c0_4], %7 {strides = array<i32>} : memref<8x256xf32, #tpu.memory_space<vmem>>, vector<8x256xf32>,
    return
  }
  func.func @transform_0(%arg0: i32, %arg1: i32) -> (i32, i32) {
    %c0_i32 = arith.constant 0 : i32
    return %arg0, %arg1 : i32, i32
  }
  func.func @transform_1(%arg0: i32, %arg1: i32) -> (i32, i32) {
    %c0_i32 = arith.constant 0 : i32
    %c0_i32_0 = arith.constant 0 : i32
    return %arg0, %c0_i32 : i32, i32
  }
  func.func @transform_2(%arg0: i32, %arg1: i32) -> (i32, i32) {
    %c0_i32 = arith.constant 0 : i32
    return %arg0, %arg1 : i32, i32
  }
}

</mosaic_0001>

<llo_original>
// kernel: tpu_custom_call.1
$region0: #{tpu_custom_call.1}
  #allocation0 [shape = 'u32[]', space=smem, size = 0x4, offset = 0x4, fixed_abs, tag = 'smem constant byte address 0x4 - core index']
  #allocation1 [shape = 'u32[144,128]{1,0:T(1,128)}', space=vmem, size = 0x12000, scoped, tag = 'internal scratch']
  %s0 = inlined_call_operand.hbm [shape: f32[8,256], index: 0, kind: input, shape index: {}]
  %s1 = inlined_call_operand.vmem [shape: f32[8,2], index: 1, kind: input, shape index: {}]
  %s2 = inlined_call_operand.hbm [shape: f32[8,256], index: 2, kind: output, shape index: {}]
  %s3 = sld [smem:[#allocation0]]
  $region22: #{tpu_custom_call.1} parent=0
    _
  %s5 = ssub.s32 1, %s3
  %s6 = scalar_select 0, %s5, %s3
  $region1: #{tpu_custom_call.1} parent=0
    #allocation2 [shape = 'u8[8192]{0}', space=vmem, size = 0x2000, scoped, tag = 'input window, operand 0, single buffered']
    #allocation3 [shape = 's32[1]{0}', space=sflag, size = 0x4, scoped, tag = 'scoped memory for tpu_custom_call.1']
    #allocation4 [shape = 's32[1]{0}', space=sflag, size = 0x4, scoped, tag = 'scoped memory for tpu_custom_call.1']
    #allocation5 [shape = 'u8[8192]{0}', space=vmem, size = 0x2000, scoped, tag = 'output window, operand 0, single buffered']
    %7 = vsyncpa [#allocation3], 0
    %8 = vsyncpa [#allocation4], 0
    // Predicated region
    $region2: #{tpu_custom_call.1} parent=1 // pred_check
      _
    $region3: #{tpu_custom_call.1} parent=1 // pred_check_branch
      %10 = sbr.rel (0) target = $region5
    $region4: #{tpu_custom_call.1} parent=1 // pred_region
      %s12 = ssub.s32 256, 256
      %13 = vsyncadd [#allocation3], %s12
      %s15 = sshll.u32 [#allocation2], 4
      %s16 = int_to_ptr.vmem [resolvable:$true] %s15
      %18 = dma.hbm_to_vmem [thread:$0]  %s0, 256, %s16, [#allocation3]
    $region5: #{tpu_custom_call.1} parent=1 // pred_fallthru
      _
    // Predicated region
    $region6: #{tpu_custom_call.1} parent=1 // pred_check
      _
    $region7: #{tpu_custom_call.1} parent=1 // pred_check_branch
      %20 = sbr.rel (0) target = $region9
    $region8: #{tpu_custom_call.1} parent=1 // pred_region
      _
    $region9: #{tpu_custom_call.1} parent=1 // pred_fallthru
      _
    // Predicated region
    $region10: #{tpu_custom_call.1} parent=1 // pred_check
      _
    $region11: #{tpu_custom_call.1} parent=1 // pred_check_branch
      %22 = sbr.rel (0) target = $region13
    $region12: #{tpu_custom_call.1} parent=1 // pred_region
      %23 = dma.done [#allocation3], 256
    $region13: #{tpu_custom_call.1} parent=1 // pred_fallthru
      _
    %v24 = vld [vmem:[%s1] sm:$0xff]
    %v25 = vld [vmem:[#allocation2] sm:$0xff]
    %v26 = vld [vmem:[#allocation2 + $0x8] sm:$0xff]
    %28 = vset.pattern.permute.xlu0 0
    %29 = vperm.xlu0 %28, %v24
    %v30 = vpop.permute.xlu0 %29
    %v32 = vmul.f32 %v25, %v30
    %v33 = vmul.f32 %v26, %v30
    %34 = vset.pattern.permute.xlu0 1
    %35 = vperm.xlu0 %34, %v24
    %v36 = vpop.permute.xlu0 %35
    %v38 = vadd.f32 %v32, %v36
    %v39 = vadd.f32 %v33, %v36
    %40 = vst [vmem:[#allocation5] sm:$0xff] %v38
    %41 = vst [vmem:[#allocation5 + $0x8] sm:$0xff] %v39
    // Predicated region
    $region14: #{tpu_custom_call.1} parent=1 // pred_check
      _
    $region15: #{tpu_custom_call.1} parent=1 // pred_check_branch
      %43 = sbr.rel (0) target = $region17
    $region16: #{tpu_custom_call.1} parent=1 // pred_region
      %s45 = ssub.s32 256, 256
      %46 = vsyncadd [#allocation4], %s45
      %s48 = sshll.u32 [#allocation5], 4
      %s49 = int_to_ptr.vmem [resolvable:$true] %s48
      %51 = dma.vmem_to_hbm [thread:$0]  %s49, 256, %s2, [#allocation4]
    $region17: #{tpu_custom_call.1} parent=1 // pred_fallthru
      _
    // Predicated region
    $region18: #{tpu_custom_call.1} parent=1 // pred_check
      _
    $region19: #{tpu_custom_call.1} parent=1 // pred_check_branch
      %53 = sbr.rel (0) target = $region21
    $region20: #{tpu_custom_call.1} parent=1 // pred_region
      %54 = dma.done [#allocation4], 256
    $region21: #{tpu_custom_call.1} parent=1 // pred_fallthru
      _
    %55 = vsyncpa [#allocation3], 1
    %56 = vsyncpa [#allocation4], 1

</llo_original>
